<compile_context>
chip_gen: v6e
topology: v6e:2x2x1
jax: 0.10.0
libtpu: 0.0.40
codegen_flags: <defaults>
</compile_context>

<pallas_src>
import jax
import jax.numpy as jnp
from jax.experimental import pallas as pl
from jax.experimental.pallas import tpu as pltpu


# ----------------------------------------------------------------------------
# Kernel A: fused spatial stage (folded GCN operator for both units).
# ----------------------------------------------------------------------------

def _gcn_kernel(x_ref, bg1_ref, cg1_ref, bg2_ref, cg2_ref, g1_ref, g2_ref):
    """x_ref  : (TM, V*Cin) bf16   rows = flattened (N*T) frames
    bgU_ref: (V*Cin, V*Cu) bf16  folded GCN operator for unit U (BN scale folded)
    cgU_ref: (1, V*Cu)     f32   folded bias + BN affine (tiled over V)
    gU_ref : (TM, V*Cu)    bf16  ReLU'd GCN output (feeds the temporal kernel)
    """
    x = x_ref[...]
    y1 = jnp.dot(x, bg1_ref[...], preferred_element_type=jnp.float32)
    g1_ref[...] = jnp.maximum(y1 + cg1_ref[...], 0.0).astype(g1_ref.dtype)
    y2 = jnp.dot(x, bg2_ref[...], preferred_element_type=jnp.float32)
    g2_ref[...] = jnp.maximum(y2 + cg2_ref[...], 0.0).astype(g2_ref.dtype)


def spatial_stage(x_flat, bg1, cg1, bg2, cg2):
    m, kdim = x_flat.shape
    n1, n2 = bg1.shape[1], bg2.shape[1]
    tm = m if m <= 512 else 512           # ~512-row tiles reach the HBM roofline
    grid = (pl.cdiv(m, tm),)
    # TODO(synk): for large channel counts the dense folded operator (V*Cin, V*Cu)
    # should be tiled over its output columns (or fall back to the per-A_k two-step
    # form) so the resident weight slab fits v7x's 64 MiB VMEM.
    return pl.pallas_call(
        _gcn_kernel,
        out_shape=(jax.ShapeDtypeStruct((m, n1), jnp.bfloat16),
                   jax.ShapeDtypeStruct((m, n2), jnp.bfloat16)),
        grid=grid,
        in_specs=[
            pl.BlockSpec((tm, kdim), lambda i: (i, 0)),
            pl.BlockSpec((kdim, n1), lambda i: (0, 0)),
            pl.BlockSpec((1, n1), lambda i: (0, 0)),
            pl.BlockSpec((kdim, n2), lambda i: (0, 0)),
            pl.BlockSpec((1, n2), lambda i: (0, 0)),
        ],
        out_specs=[
            pl.BlockSpec((tm, n1), lambda i: (i, 0)),
            pl.BlockSpec((tm, n2), lambda i: (i, 0)),
        ],
        compiler_params=pltpu.CompilerParams(
            dimension_semantics=("parallel",),
            vmem_limit_bytes=64 * 1024 * 1024),
    )(x_flat, bg1, cg1, bg2, cg2)


# ----------------------------------------------------------------------------
# Kernel B: per-unit temporal stage
#           (K accumulating matmuls + BN/ReLU + fused residual path).
# ----------------------------------------------------------------------------

def _make_tcn_kernel(*, T, V, K, has_down):
    pad = (K - 1) // 2

    def body(g_ref, x_ref, w_ref, c_ref, wd_ref, cd_ref, o_ref, acc_ref):
        """g_ref : (T*V, Cu)  bf16  GCN output, rows = (t, v), lanes = channel
        x_ref : (T*V, Cin) bf16  original input (residual path)
        w_ref : (K, Cu, Cu) bf16 folded temporal conv weights
        c_ref : (1, Cu)     f32  folded bias + BN affine
        wd_ref: (Cin, Cu)   bf16 folded 1x1 down conv  (None => identity residual)
        cd_ref: (1, Cu)     f32
        o_ref : (T*V, Cu)   f32  tcn(gcn(x)) + residual
        acc_ref: VMEM (T*V, Cu) f32 accumulator
        """
        # Temporal conv as K accumulating matmuls; the halo is handled by statically
        # clipping each tap's input/output row range — no padded staging copy, no
        # im2col scratch.  The center tap covers every output row: use it to init.
        acc_ref[...] = jnp.dot(g_ref[...], w_ref[pad],
                               preferred_element_type=jnp.float32)
        for dt in range(K):
            if dt == pad:
                continue
            t_lo = max(0, pad - dt)           # first valid output time step
            t_hi = min(T, T + pad - dt)       # one-past-last valid output step
            if t_hi <= t_lo:
                continue
            rows = (t_hi - t_lo) * V
            tap = g_ref[pl.ds((t_lo + dt - pad) * V, rows), :]
            acc_ref[pl.ds(t_lo * V, rows), :] += jnp.dot(
                tap, w_ref[dt], preferred_element_type=jnp.float32)

        y = jnp.maximum(acc_ref[...] + c_ref[...], 0.0)   # folded bias/BN + ReLU
        if wd_ref is None:                                 # identity residual
            res = x_ref[...].astype(jnp.float32)
        else:                                              # folded 1x1 down conv
            res = jnp.dot(x_ref[...], wd_ref[...],
                          preferred_element_type=jnp.float32)
            res = jnp.maximum(res + cd_ref[...], 0.0)
        o_ref[...] = (y + res).astype(o_ref.dtype)

    if has_down:
        def kernel(g_ref, x_ref, w_ref, c_ref, wd_ref, cd_ref, o_ref, acc_ref):
            body(g_ref, x_ref, w_ref, c_ref, wd_ref, cd_ref, o_ref, acc_ref)
    else:
        def kernel(g_ref, x_ref, w_ref, c_ref, o_ref, acc_ref):
            body(g_ref, x_ref, w_ref, c_ref, None, None, o_ref, acc_ref)
    return kernel


def temporal_stage(g, x3, w, cb, wd, cd, *, T, V, K):
    n, tv, cw = g.shape
    cin = x3.shape[-1]
    has_down = wd is not None
    kern = _make_tcn_kernel(T=T, V=V, K=K, has_down=has_down)
    in_specs = [
        pl.BlockSpec((pl.Squeezed(), tv, cw), lambda b: (b, 0, 0)),
        pl.BlockSpec((pl.Squeezed(), tv, cin), lambda b: (b, 0, 0)),
        pl.BlockSpec((K, cw, cw), lambda b: (0, 0, 0)),
        pl.BlockSpec((1, cw), lambda b: (0, 0)),
    ]
    args = [g, x3, w, cb]
    if has_down:
        in_specs += [pl.BlockSpec((cin, cw), lambda b: (0, 0)),
                     pl.BlockSpec((1, cw), lambda b: (0, 0))]
        args += [wd, cd]
    # TODO(synk): for long sequences (T~300) tile the time axis with a (K-1)/2-step
    # halo (manual DMA) so per-step tiles fit v7x's 64 MiB VMEM and both TensorCores
    # get work when N is small.
    return pl.pallas_call(
        kern,
        out_shape=jax.ShapeDtypeStruct((n, tv, cw), jnp.float32),
        grid=(n,),
        in_specs=in_specs,
        out_specs=pl.BlockSpec((pl.Squeezed(), tv, cw), lambda b: (b, 0, 0)),
        scratch_shapes=[pltpu.VMEM((tv, cw), jnp.float32)],
        compiler_params=pltpu.CompilerParams(
            dimension_semantics=("parallel",),
            vmem_limit_bytes=64 * 1024 * 1024),
    )(*args)


# ----------------------------------------------------------------------------
# Parameter construction (deterministic, synthetic)
# ----------------------------------------------------------------------------

def _bn_params(key, c):
    k1, k2, k3, k4 = jax.random.split(key, 4)
    gamma = 1.0 + 0.1 * jax.random.normal(k1, (c,), jnp.float32)
    beta = 0.1 * jax.random.normal(k2, (c,), jnp.float32)
    mean = 0.1 * jax.random.normal(k3, (c,), jnp.float32)
    var = 1.0 + 0.1 * jnp.abs(jax.random.normal(k4, (c,), jnp.float32))
    scale = gamma * jax.lax.rsqrt(var + 1e-5)
    shift = beta - mean * scale
    return scale, shift


def init_tcn_gcn_unit(key, in_ch, out_ch, ka, kernel_size, stride):
    ks = jax.random.split(key, 8)
    p = {"stride": stride}
    # unit_gcn: Ka 1x1 convs ((Cin,Cout) each, with bias), summed, then BN+ReLU.
    p["gcn_W"] = 0.1 * jax.random.normal(ks[0], (ka, in_ch, out_ch), jnp.float32)
    p["gcn_b"] = jnp.sum(
        0.05 * jax.random.normal(ks[1], (ka, out_ch), jnp.float32), axis=0)
    p["gcn_bn"] = _bn_params(ks[2], out_ch)
    # tcn1 = Unit2D(out_ch, out_ch, kernel_size, stride)
    p["tcn_W"] = 0.1 * jax.random.normal(
        ks[3], (kernel_size, out_ch, out_ch), jnp.float32)
    p["tcn_b"] = 0.05 * jax.random.normal(ks[4], (out_ch,), jnp.float32)
    p["tcn_bn"] = _bn_params(ks[5], out_ch)
    # down1 = Unit2D(in_ch, out_ch, kernel_size=1, stride) iff in!=out or stride!=1
    if in_ch != out_ch or stride != 1:
        p["down_W"] = 0.1 * jax.random.normal(ks[6], (in_ch, out_ch), jnp.float32)
        p["down_b"] = 0.05 * jax.random.normal(ks[7], (out_ch,), jnp.float32)
        p["down_bn"] = _bn_params(jax.random.fold_in(key, 99), out_ch)
    return p


def init_multiscale(key, in_channels, out_channels, ka, kernel_size=9, stride=1):
    k1, k2 = jax.random.split(key)
    half = out_channels // 2
    return {
        "unit1": init_tcn_gcn_unit(k1, in_channels, half, ka, kernel_size, stride),
        "unit2": init_tcn_gcn_unit(k2, in_channels, out_channels - half, ka,
                                   kernel_size * 2 - 1, stride),
    }


# ----------------------------------------------------------------------------
# Forward pass (wrapper does the algebraic folding; kernels do the hot path)
# ----------------------------------------------------------------------------

def multiscale_forward(x_nctv, params, A):
    p1, p2 = params["unit1"], params["unit2"]
    stride = p1["stride"]
    n, cin, t, v = x_nctv.shape
    c1 = p1["gcn_W"].shape[-1]
    c2 = p2["gcn_W"].shape[-1]
    # TODO(synk): V=25 (NTU skeleton) needs V padded to a multiple of 16 (bf16
    # sublane packing); the toy config uses V=16.
    assert v % 8 == 0

    x_ntvc = jnp.transpose(x_nctv, (0, 2, 3, 1)).astype(jnp.float32)
    x_flat = x_ntvc.reshape(n * t, v * cin).astype(jnp.bfloat16)  # rows=(n,t), lanes=(v,c)
    x3 = x_ntvc.reshape(n, t * v, cin).astype(jnp.bfloat16)       # rows=(t,v), lanes=c

    # ---- fold each unit's GCN (+BN) into a (V*Cin, V*Cu) lane-dense operator ----
    def fold_gcn(p):
        sc, sh = p["gcn_bn"]
        w = p["gcn_W"] * sc                                  # (Ka, Cin, Cu)
        cu = w.shape[-1]
        bg = jnp.einsum("kuv,kcd->ucvd", A, w).reshape(v * cin, v * cu)
        cg = jnp.tile(p["gcn_b"] * sc + sh, v).reshape(1, v * cu)
        return bg.astype(jnp.bfloat16), cg

    bg1, cg1 = fold_gcn(p1)
    bg2, cg2 = fold_gcn(p2)

    # ---- kernel A: spatial GCN for both units ----
    g1f, g2f = spatial_stage(x_flat, bg1, cg1, bg2, cg2)
    g1 = g1f.reshape(n, t * v, c1)     # free row-major reshapes
    g2 = g2f.reshape(n, t * v, c2)

    # ---- fold temporal conv (+BN) and the 1x1 down conv (+BN) per unit ----
    def fold_tcn(p):
        sc, sh = p["tcn_bn"]
        w = (p["tcn_W"] * sc).astype(jnp.bfloat16)           # (K, Cu, Cu)
        cb = (p["tcn_b"] * sc + sh).reshape(1, -1)
        return w, cb

    def fold_down(p):
        if "down_W" not in p:
            return None, None                                # identity residual
        sc, sh = p["down_bn"]
        wd = (p["down_W"] * sc).astype(jnp.bfloat16)         # (Cin, Cu)
        cd = (p["down_b"] * sc + sh).reshape(1, -1)
        return wd, cd

    # ---- kernel B (per unit): temporal conv + BN/ReLU + fused residual ----
    outs = []
    for p, g, cu in ((p1, g1, c1), (p2, g2, c2)):
        w, cb = fold_tcn(p)
        wd, cd = fold_down(p)
        k = p["tcn_W"].shape[0]
        o = temporal_stage(g, x3, w, cb, wd, cd, T=t, V=v, K=k)
        o = o.reshape(n, t, v, cu)
        # TODO(synk): stride>1 wastes a factor `stride` of temporal FLOPs; compute
        # only the strided output rows inside the kernel if strided layers get hot.
        if stride != 1:
            o = o[:, ::stride]
        outs.append(jnp.transpose(o, (0, 3, 1, 2)))
    return jnp.concatenate(outs, axis=1)        # (N, C_out, T_out, V)


# ----------------------------------------------------------------------------
# Pure-JAX reference (f32) for correctness checking
# ----------------------------------------------------------------------------

def _ref_gcn(x, A, W, b, scale, shift):
    xa = jnp.einsum("ntuc,kuv->kntvc", x, A)
    y = jnp.einsum("kntvc,kcd->ntvd", xa, W) + b
    return jax.nn.relu(y * scale + shift)


def _ref_unit2d(x, W, b, scale, shift, stride):
    k = W.shape[0]
    pad = (k - 1) // 2
    t = x.shape[1]
    t_out = (t - 1) // stride + 1
    xp = jnp.pad(x, ((0, 0), (pad, pad), (0, 0), (0, 0)))
    y = 0.0
    for dt in range(k):
        tap = jax.lax.slice_in_dim(xp, dt, dt + (t_out - 1) * stride + 1,
                                   stride, axis=1)
        y = y + jnp.einsum("ntvc,cd->ntvd", tap, W[dt])
    y = y + b
    return jax.nn.relu(y * scale + shift)


def reference_forward(x_nctv, params, A):
    x = jnp.transpose(x_nctv, (0, 2, 3, 1)).astype(jnp.float32)
    outs = []
    for p in (params["unit1"], params["unit2"]):
        stride = p["stride"]
        g = _ref_gcn(x, A, p["gcn_W"], p["gcn_b"], *p["gcn_bn"])
        tc = _ref_unit2d(g, p["tcn_W"], p["tcn_b"], *p["tcn_bn"], stride)
        if "down_W" in p:
            d = _ref_unit2d(x, p["down_W"][None], p["down_b"], *p["down_bn"], stride)
        else:
            d = x[:, ::stride]
        outs.append(tc + d)
    y = jnp.concatenate(outs, axis=-1)
    return jnp.transpose(y, (0, 3, 1, 2))


# ----------------------------------------------------------------------------
if __name__ == "__main__":
    N, C_IN, T, V = 2, 4, 16, 16
    OUT_CHANNELS = 32
    KA = 3        # number of adjacency matrices (spatial partitions)
    STRIDE = 1

    key = jax.random.PRNGKey(0)
    kx, ka_key, kp = jax.random.split(key, 3)

    x = jax.random.normal(kx, (N, C_IN, T, V), jnp.float32)
    A = jnp.abs(jax.random.normal(ka_key, (KA, V, V), jnp.float32))
    A = A / jnp.sum(A, axis=-1, keepdims=True)   # row-normalized synthetic adjacency

    params = init_multiscale(kp, C_IN, OUT_CHANNELS, KA, kernel_size=9, stride=STRIDE)

    y = jax.block_until_ready(multiscale_forward(x, params, A))
    y_ref = jax.block_until_ready(reference_forward(x, params, A))

    t_out = (T - 1) // STRIDE + 1
    assert y.shape == (N, OUT_CHANNELS, t_out, V), y.shape
    assert bool(jnp.all(jnp.isfinite(y)))
    err = float(jnp.max(jnp.abs(y - y_ref)))
    tol = 5e-2 + 5e-2 * float(jnp.max(jnp.abs(y_ref)))   # bf16-matmul tolerance
    assert err < tol, f"max abs err {err} (tol {tol})"
    print("KERNEL_OK")
</pallas_src>

<mosaic_0001>
module attributes {stable_mosaic.version = 11 : i64} {
  func.func @_gcn_kernel(%arg0: i32, %arg1: memref<32x64xbf16, #tpu.memory_space<vmem>>, %arg2: memref<64x256xbf16, #tpu.memory_space<vmem>>, %arg3: memref<1x256xf32, #tpu.memory_space<vmem>>, %arg4: memref<64x256xbf16, #tpu.memory_space<vmem>>, %arg5: memref<1x256xf32, #tpu.memory_space<vmem>>, %arg6: memref<32x256xbf16, #tpu.memory_space<vmem>>, %arg7: memref<32x256xbf16, #tpu.memory_space<vmem>>) attributes {dimension_semantics = [#tpu.dimension_semantics<parallel>], iteration_bounds = array<i64: 1>, scalar_prefetch = 0 : i64, scratch_operands = 0 : i64, tpu.core_type = #tpu.core_type<tc>, window_params = [{transform_indices = @transform_0, window_bounds = array<i64: 32, 64>}, {pipeline_mode = #tpu.pipeline_mode<synchronous>, transform_indices = @transform_1, window_bounds = array<i64: 64, 256>}, {pipeline_mode = #tpu.pipeline_mode<synchronous>, transform_indices = @transform_2, window_bounds = array<i64: 1, 256>}, {pipeline_mode = #tpu.pipeline_mode<synchronous>, transform_indices = @transform_3, window_bounds = array<i64: 64, 256>}, {pipeline_mode = #tpu.pipeline_mode<synchronous>, transform_indices = @transform_4, window_bounds = array<i64: 1, 256>}, {transform_indices = @transform_5, window_bounds = array<i64: 32, 256>}, {transform_indices = @transform_6, window_bounds = array<i64: 32, 256>}]} {
    %c0 = arith.constant 0 : index
    %c0_0 = arith.constant 0 : index
    %0 = vector.load %arg1[%c0, %c0_0] : memref<32x64xbf16, #tpu.memory_space<vmem>>, vector<32x64xbf16>
    %c0_1 = arith.constant 0 : index
    %c0_2 = arith.constant 0 : index
    %1 = vector.load %arg2[%c0_1, %c0_2] : memref<64x256xbf16, #tpu.memory_space<vmem>>, vector<64x256xbf16>
    %cst = arith.constant dense<0.000000e+00> : vector<32x256xf32>
    %2 = tpu.matmul %0, %1, %cst {dimension_numbers = #tpu.dot_dimension_numbers<[1], [0], [0], [1], [0, 0, 1, 1], [], []>} : vector<32x64xbf16>, vector<64x256xbf16>, vector<32x256xf32> -> vector<32x256xf32>
    %c0_3 = arith.constant 0 : index
    %c0_4 = arith.constant 0 : index
    %3 = vector.load %arg3[%c0_3, %c0_4] : memref<1x256xf32, #tpu.memory_space<vmem>>, vector<1x256xf32>
    %4 = vector.broadcast %3 : vector<1x256xf32> to vector<32x256xf32>
    %5 = arith.addf %2, %4 : vector<32x256xf32>
    %cst_5 = arith.constant 0.000000e+00 : f32
    %6 = vector.broadcast %cst_5 : f32 to vector<32x256xf32>
    %7 = arith.maximumf %5, %6 : vector<32x256xf32>
    %8 = arith.truncf %7 : vector<32x256xf32> to vector<32x256xbf16>
    %c0_6 = arith.constant 0 : index
    %c0_7 = arith.constant 0 : index
    %9 = vector.load %arg6[%c0_6, %c0_7] : memref<32x256xbf16, #tpu.memory_space<vmem>>, vector<32x256xbf16>
    tpu.vector_store %arg6[%c0_6, %c0_7], %8 {strides = array<i32>} : memref<32x256xbf16, #tpu.memory_space<vmem>>, vector<32x256xbf16>,
    %c0_8 = arith.constant 0 : index
    %c0_9 = arith.constant 0 : index
    %10 = vector.load %arg4[%c0_8, %c0_9] : memref<64x256xbf16, #tpu.memory_space<vmem>>, vector<64x256xbf16>
    %cst_10 = arith.constant dense<0.000000e+00> : vector<32x256xf32>
    %11 = tpu.matmul %0, %10, %cst_10 {dimension_numbers = #tpu.dot_dimension_numbers<[1], [0], [0], [1], [0, 0, 1, 1], [], []>} : vector<32x64xbf16>, vector<64x256xbf16>, vector<32x256xf32> -> vector<32x256xf32>
    %c0_11 = arith.constant 0 : index
    %c0_12 = arith.constant 0 : index
    %12 = vector.load %arg5[%c0_11, %c0_12] : memref<1x256xf32, #tpu.memory_space<vmem>>, vector<1x256xf32>
    %13 = vector.broadcast %12 : vector<1x256xf32> to vector<32x256xf32>
    %14 = arith.addf %11, %13 : vector<32x256xf32>
    %cst_13 = arith.constant 0.000000e+00 : f32
    %15 = vector.broadcast %cst_13 : f32 to vector<32x256xf32>
    %16 = arith.maximumf %14, %15 : vector<32x256xf32>
    %17 = arith.truncf %16 : vector<32x256xf32> to vector<32x256xbf16>
    %c0_14 = arith.constant 0 : index
    %c0_15 = arith.constant 0 : index
    %18 = vector.load %arg7[%c0_14, %c0_15] : memref<32x256xbf16, #tpu.memory_space<vmem>>, vector<32x256xbf16>
    tpu.vector_store %arg7[%c0_14, %c0_15], %17 {strides = array<i32>} : memref<32x256xbf16, #tpu.memory_space<vmem>>, vector<32x256xbf16>,
    return
  }
  func.func @transform_0(%arg0: i32) -> (i32, i32) {
    %c0_i32 = arith.constant 0 : i32
    %c0_i32_0 = arith.constant 0 : i32
    return %arg0, %c0_i32 : i32, i32
  }
  func.func @transform_1(%arg0: i32) -> (i32, i32) {
    %c0_i32 = arith.constant 0 : i32
    %c0_i32_0 = arith.constant 0 : i32
    %c0_i32_1 = arith.constant 0 : i32
    return %c0_i32, %c0_i32_0 : i32, i32
  }
  func.func @transform_2(%arg0: i32) -> (i32, i32) {
    %c0_i32 = arith.constant 0 : i32
    %c0_i32_0 = arith.constant 0 : i32
    %c0_i32_1 = arith.constant 0 : i32
    return %c0_i32, %c0_i32_0 : i32, i32
  }
  func.func @transform_3(%arg0: i32) -> (i32, i32) {
    %c0_i32 = arith.constant 0 : i32
    %c0_i32_0 = arith.constant 0 : i32
    %c0_i32_1 = arith.constant 0 : i32
    return %c0_i32, %c0_i32_0 : i32, i32
  }
  func.func @transform_4(%arg0: i32) -> (i32, i32) {
    %c0_i32 = arith.constant 0 : i32
    %c0_i32_0 = arith.constant 0 : i32
    %c0_i32_1 = arith.constant 0 : i32
    return %c0_i32, %c0_i32_0 : i32, i32
  }
  func.func @transform_5(%arg0: i32) -> (i32, i32) {
    %c0_i32 = arith.constant 0 : i32
    %c0_i32_0 = arith.constant 0 : i32
    return %arg0, %c0_i32 : i32, i32
  }
  func.func @transform_6(%arg0: i32) -> (i32, i32) {
    %c0_i32 = arith.constant 0 : i32
    %c0_i32_0 = arith.constant 0 : i32
    return %arg0, %c0_i32 : i32, i32
  }
}

</mosaic_0001>

<llo_original>
// kernel: tpu_custom_call.1
$region0: #{tpu_custom_call.1}
  #allocation0 [shape = 'u32[]', space=smem, size = 0x4, offset = 0x4, fixed_abs, tag = 'smem constant byte address 0x4 - core index']
  #allocation1 [shape = 'u32[144,128]{1,0:T(1,128)}', space=vmem, size = 0x12000, scoped, tag = 'internal scratch']
  %s0 = inlined_call_operand.hbm [shape: bf16[32,64], index: 0, kind: input, shape index: {}]
  %s1 = inlined_call_operand.hbm [shape: bf16[64,256], index: 1, kind: input, shape index: {}]
  %s2 = inlined_call_operand.vmem [shape: f32[1,256], index: 2, kind: input, shape index: {}]
  %s3 = inlined_call_operand.hbm [shape: bf16[64,256], index: 3, kind: input, shape index: {}]
  %s4 = inlined_call_operand.vmem [shape: f32[1,256], index: 4, kind: input, shape index: {}]
  %s5 = inlined_call_operand.hbm [shape: bf16[32,256], index: 5, kind: output, shape index: {0}]
  %s6 = inlined_call_operand.hbm [shape: bf16[32,256], index: 6, kind: output, shape index: {1}]
  %7 = xla_tuple %s5, %s6
  %s8 = sld [smem:[#allocation0]]
  $region50: #{tpu_custom_call.1} parent=0
    _
  %s10 = ssub.s32 1, %s8
  %s11 = scalar_select 0, %s10, %s8
  $region1: #{tpu_custom_call.1} parent=0
    #allocation2 [shape = 'u8[8192]{0}', space=vmem, size = 0x2000, scoped, tag = 'input window, operand 0, single buffered']
    #allocation3 [shape = 's32[1]{0}', space=sflag, size = 0x4, scoped, tag = 'scoped memory for tpu_custom_call.1']
    #allocation4 [shape = 's32[1]{0}', space=sflag, size = 0x4, scoped, tag = 'scoped memory for tpu_custom_call.1']
    #allocation5 [shape = 'u8[32768]{0}', space=vmem, size = 0x8000, scoped, tag = 'input window, operand 1, single buffered']
    #allocation6 [shape = 's32[1]{0}', space=sflag, size = 0x4, scoped, tag = 'scoped memory for tpu_custom_call.1']
    #allocation7 [shape = 'u8[32768]{0}', space=vmem, size = 0x8000, scoped, tag = 'input window, operand 3, single buffered']
    #allocation8 [shape = 'u8[16384]{0}', space=vmem, size = 0x4000, scoped, tag = 'output window, operand 0, single buffered']
    #allocation9 [shape = 'u8[16384]{0}', space=vmem, size = 0x4000, scoped, tag = 'output window, operand 1, single buffered']
    #allocation10 [shape = 's32[1]{0}', space=sflag, size = 0x4, scoped, tag = 'scoped memory for tpu_custom_call.1']
    %12 = vsyncpa [#allocation3], 0
    %13 = vsyncpa [#allocation6], 0
    %14 = vsyncpa [#allocation4], 0
    %15 = vsyncpa [#allocation10], 0
    // Predicated region
    $region2: #{tpu_custom_call.1} parent=1 // pred_check
      _
    $region3: #{tpu_custom_call.1} parent=1 // pred_check_branch
      %17 = sbr.rel (0) target = $region5
    $region4: #{tpu_custom_call.1} parent=1 // pred_region
      %s19 = ssub.s32 256, 256
      %20 = vsyncadd [#allocation3], %s19
      %s21 = sshll.u32 [#allocation2], 4
      %s22 = int_to_ptr.vmem [resolvable:$true] %s21
      %27 = dma.hbm_to_vmem [thread:$0]  %s0, 256, %s22, [#allocation3], 64, 64, 4
    $region5: #{tpu_custom_call.1} parent=1 // pred_fallthru
      _
    // Predicated region
    $region6: #{tpu_custom_call.1} parent=1 // pred_check
      _
    $region7: #{tpu_custom_call.1} parent=1 // pred_check_branch
      %29 = sbr.rel (0) target = $region9
    $region8: #{tpu_custom_call.1} parent=1 // pred_region
      %s31 = ssub.s32 1024, 1024
      %32 = vsyncadd [#allocation6], %s31
      %s33 = sshll.u32 [#allocation5], 4
      %s34 = int_to_ptr.vmem [resolvable:$true] %s33
      %39 = dma.hbm_to_vmem [thread:$0]  %s1, 1024, %s34, [#allocation6], 128, 128, 8
    $region9: #{tpu_custom_call.1} parent=1 // pred_fallthru
      _
    // Predicated region
    $region10: #{tpu_custom_call.1} parent=1 // pred_check
      _
    $region11: #{tpu_custom_call.1} parent=1 // pred_check_branch
      %41 = sbr.rel (0) target = $region13
    $region12: #{tpu_custom_call.1} parent=1 // pred_region
      _
    $region13: #{tpu_custom_call.1} parent=1 // pred_fallthru
      _
    // Predicated region
    $region14: #{tpu_custom_call.1} parent=1 // pred_check
      _
    $region15: #{tpu_custom_call.1} parent=1 // pred_check_branch
      %43 = sbr.rel (0) target = $region17
    $region16: #{tpu_custom_call.1} parent=1 // pred_region
      %s45 = ssub.s32 1024, 1024
      %46 = vsyncadd [#allocation6], %s45
      %s47 = sshll.u32 [#allocation7], 4
      %s48 = int_to_ptr.vmem [resolvable:$true] %s47
      %53 = dma.hbm_to_vmem [thread:$0]  %s3, 1024, %s48, [#allocation6], 128, 128, 8
    $region17: #{tpu_custom_call.1} parent=1 // pred_fallthru
      _
    // Predicated region
    $region18: #{tpu_custom_call.1} parent=1 // pred_check
      _
    $region19: #{tpu_custom_call.1} parent=1 // pred_check_branch
      %55 = sbr.rel (0) target = $region21
    $region20: #{tpu_custom_call.1} parent=1 // pred_region
      _
    $region21: #{tpu_custom_call.1} parent=1 // pred_fallthru
      _
    // Predicated region
    $region22: #{tpu_custom_call.1} parent=1 // pred_check
      _
    $region23: #{tpu_custom_call.1} parent=1 // pred_check_branch
      %57 = sbr.rel (0) target = $region25
    $region24: #{tpu_custom_call.1} parent=1 // pred_region
      %58 = dma.done [#allocation3], 256
    $region25: #{tpu_custom_call.1} parent=1 // pred_fallthru
      _
    // Predicated region
    $region26: #{tpu_custom_call.1} parent=1 // pred_check
      _
    $region27: #{tpu_custom_call.1} parent=1 // pred_check_branch
      %60 = sbr.rel (0) target = $region29
    $region28: #{tpu_custom_call.1} parent=1 // pred_region
      %61 = dma.done [#allocation6], 1024
    $region29: #{tpu_custom_call.1} parent=1 // pred_fallthru
      _
    // Predicated region
    $region30: #{tpu_custom_call.1} parent=1 // pred_check
      _
    $region31: #{tpu_custom_call.1} parent=1 // pred_check_branch
      %63 = sbr.rel (0) target = $region33
    $region32: #{tpu_custom_call.1} parent=1 // pred_region
      %64 = dma.done [#allocation6], 1024
    $region33: #{tpu_custom_call.1} parent=1 // pred_fallthru
      _
    %v66 = vld [vmem:[#allocation2] sm:$0xf]
    %v67 = vld [vmem:[#allocation2 + $0x4] sm:$0xf]
    %v68 = vld [vmem:[#allocation2 + $0x8] sm:$0xf]
    %v69 = vld [vmem:[#allocation2 + $0xc] sm:$0xf]
    %v70 = vld [vmem:[#allocation5] sm:$0xff]
    %v71 = vld [vmem:[#allocation5 + $0x8] sm:$0xff]
    %v72 = vld [vmem:[#allocation5 + $0x10] sm:$0xff]
    %v73 = vld [vmem:[#allocation5 + $0x18] sm:$0xff]
    %v74 = vld [vmem:[#allocation5 + $0x20] sm:$0xff]
    %v75 = vld [vmem:[#allocation5 + $0x28] sm:$0xff]
    %v76 = vld [vmem:[#allocation5 + $0x30] sm:$0xff]
    %v77 = vld [vmem:[#allocation5 + $0x38] sm:$0xff]
    %v78 = vld [vmem:[%s2] sm:$0x3]
    %v80 = vlaneseq
    %v81 = vshrl.u32 %v80, 7
    %v82 = vsub.s32 0, %v81
    %v83 = vrot.slane %v78, %v82
    %v84 = vlaneseq
    %v85 = vshrl.u32 %v84, 7
    %v86 = vsub.s32 1, %v85
    %v87 = vrot.slane %v78, %v86
    %v94 = vunpack.c.l.b16 %v66
    %v95 = vunpack.c.l.b16 %v67
    %v96 = vunpack.c.l.b16 %v68
    %v97 = vunpack.c.l.b16 %v69
    %v98 = vpack.c.b16 %v95, %v94
    %v99 = vpack.c.b16 %v97, %v96
    %v108 = vunpack.c.l.b16 %v70
    %v109 = vunpack.c.h.b16 %v70
    %v110 = vunpack.c.l.b16 %v71
    %v111 = vunpack.c.h.b16 %v71
    %v112 = vunpack.c.l.b16 %v72
    %v113 = vunpack.c.h.b16 %v72
    %v114 = vunpack.c.l.b16 %v73
    %v115 = vunpack.c.h.b16 %v73
    %v116 = vunpack.c.l.b16 %v74
    %v117 = vunpack.c.h.b16 %v74
    %v118 = vunpack.c.l.b16 %v75
    %v119 = vunpack.c.h.b16 %v75
    %v120 = vunpack.c.l.b16 %v76
    %v121 = vunpack.c.h.b16 %v76
    %v122 = vunpack.c.l.b16 %v77
    %v123 = vunpack.c.h.b16 %v77
    %v124 = vpack.c.b16 %v110, %v108
    %v125 = vpack.c.b16 %v111, %v109
    %v126 = vpack.c.b16 %v114, %v112
    %v127 = vpack.c.b16 %v115, %v113
    %v128 = vpack.c.b16 %v118, %v116
    %v129 = vpack.c.b16 %v119, %v117
    %v130 = vpack.c.b16 %v122, %v120
    %v131 = vpack.c.b16 %v123, %v121
    %vm140 = vcmask 523264
    %v142 = vsel %vm140, %v98, 0
    %v145 = vsel %vm140, %v99, 0
    %147 = vmatprep.subr.bf16.mxu0 0
    %148 = vmatpush1.bf16.msra.mxu0 0
    %149 = vmatprep.subr.bf16.mxu0 0
    %150 = vmatpush1.bf16.msra.mxu0 0
    %151 = vmatprep.subr.bf16.mxu0 0
    %152 = vmatpush1.bf16.msra.mxu0 0
    %153 = vmatprep.subr.bf16.mxu0 0
    %154 = vmatpush1.bf16.msra.mxu0 0
    %155 = vmatprep.subr.bf16.mxu0 %v131
    %156 = vmatpush1.bf16.msra.mxu0 %v130
    %157 = vmatprep.subr.bf16.mxu0 %v129
    %158 = vmatpush1.bf16.msra.mxu0 %v128
    %159 = vmatprep.subr.bf16.mxu0 %v127
    %160 = vmatpush1.bf16.msra.mxu0 %v126
    %161 = vmatprep.subr.bf16.mxu0 %v125
    %162 = vmatpush1.bf16.msra.mxu0 %v124
    %163 = vmatprep.subr.bf16.mxu0 0
    %164 = vmatpush2.bf16.msra.mxu0 0
    %165 = vmatprep.subr.bf16.mxu0 0
    %166 = vmatpush2.bf16.msra.mxu0 0
    %167 = vmatprep.subr.bf16.mxu0 0
    %168 = vmatpush2.bf16.msra.mxu0 0
    %169 = vmatprep.subr.bf16.mxu0 0
    %170 = vmatpush2.bf16.msra.mxu0 0
    %171 = vmatprep.subr.bf16.mxu0 0
    %172 = vmatpush2.bf16.msra.mxu0 0
    %173 = vmatprep.subr.bf16.mxu0 0
    %174 = vmatpush2.bf16.msra.mxu0 0
    %175 = vmatprep.subr.bf16.mxu0 0
    %176 = vmatpush2.bf16.msra.mxu0 0
    %177 = vmatprep.subr.bf16.mxu0 0
    %178 = vmatpush2.bf16.msra.mxu0 0
    %179 = vmatprep.mubr.bf16.mxu0 0
    %180 = vmatmul.mubr.bf16.gmra.mxu0 %v142
    %v181 = vpop.f32.mrf.mxu0
    %v182 = vadd.f32 %v83, %v181
    %v183 = vpop.f32.mrf.mxu0
    %v184 = vadd.f32 %v87, %v183
    %v185 = vpop.f32.mrf.mxu0
    %v186 = vadd.f32 %v83, %v185
    %v187 = vpop.f32.mrf.mxu0
    %v188 = vadd.f32 %v87, %v187
    %189 = vmatprep.mubr.bf16.mxu0 0
    %190 = vmatmul.mubr.bf16.gmra.mxu0 %v145
    %v191 = vpop.f32.mrf.mxu0
    %v192 = vadd.f32 %v83, %v191
    %v193 = vpop.f32.mrf.mxu0
    %v194 = vadd.f32 %v87, %v193
    %v195 = vpop.f32.mrf.mxu0
    %v196 = vadd.f32 %v83, %v195
    %v197 = vpop.f32.mrf.mxu0
    %v198 = vadd.f32 %v87, %v197
    %199 = vdwg.mxu0
    %v200 = vmax.f32 %v182, 0.0
    %v201 = vmax.f32 %v184, 0.0
    %v202 = vmax.f32 %v186, 0.0
    %v203 = vmax.f32 %v188, 0.0
    %v204 = vmax.f32 %v192, 0.0
    %v205 = vmax.f32 %v194, 0.0
    %v206 = vmax.f32 %v196, 0.0
    %v207 = vmax.f32 %v198, 0.0
    %v208 = vpack.c.bf16 %v202, %v200
    %v209 = vpack.c.bf16 %v203, %v201
    %v210 = vpack.c.bf16 %v206, %v204
    %v211 = vpack.c.bf16 %v207, %v205
    %v216 = vunpack.c.l.b16 %v208
    %v217 = vunpack.c.l.b16 %v209
    %v218 = vunpack.c.h.b16 %v208
    %v219 = vunpack.c.h.b16 %v209
    %v220 = vunpack.c.l.b16 %v210
    %v221 = vunpack.c.l.b16 %v211
    %v222 = vunpack.c.h.b16 %v210
    %v223 = vunpack.c.h.b16 %v211
    %v224 = vpack.c.b16 %v217, %v216
    %v225 = vpack.c.b16 %v219, %v218
    %v226 = vpack.c.b16 %v221, %v220
    %v227 = vpack.c.b16 %v223, %v222
    %232 = vst [vmem:[#allocation8] sm:$0xff] %v224
    %233 = vst [vmem:[#allocation8 + $0x8] sm:$0xff] %v225
    %234 = vst [vmem:[#allocation8 + $0x10] sm:$0xff] %v226
    %235 = vst [vmem:[#allocation8 + $0x18] sm:$0xff] %v227
    %v236 = vld [vmem:[#allocation7] sm:$0xff]
    %v237 = vld [vmem:[#allocation7 + $0x8] sm:$0xff]
    %v238 = vld [vmem:[#allocation7 + $0x10] sm:$0xff]
    %v239 = vld [vmem:[#allocation7 + $0x18] sm:$0xff]
    %v240 = vld [vmem:[#allocation7 + $0x20] sm:$0xff]
    %v241 = vld [vmem:[#allocation7 + $0x28] sm:$0xff]
    %v242 = vld [vmem:[#allocation7 + $0x30] sm:$0xff]
    %v243 = vld [vmem:[#allocation7 + $0x38] sm:$0xff]
    %v244 = vld [vmem:[%s4] sm:$0x3]
    %v246 = vlaneseq
    %v247 = vshrl.u32 %v246, 7
    %v248 = vsub.s32 0, %v247
    %v249 = vrot.slane %v244, %v248
    %v250 = vlaneseq
    %v251 = vshrl.u32 %v250, 7
    %v252 = vsub.s32 1, %v251
    %v253 = vrot.slane %v244, %v252
    %v264 = vunpack.c.l.b16 %v236
    %v265 = vunpack.c.h.b16 %v236
    %v266 = vunpack.c.l.b16 %v237
    %v267 = vunpack.c.h.b16 %v237
    %v268 = vunpack.c.l.b16 %v238
    %v269 = vunpack.c.h.b16 %v238
    %v270 = vunpack.c.l.b16 %v239
    %v271 = vunpack.c.h.b16 %v239
    %v272 = vunpack.c.l.b16 %v240
    %v273 = vunpack.c.h.b16 %v240
    %v274 = vunpack.c.l.b16 %v241
    %v275 = vunpack.c.h.b16 %v241
    %v276 = vunpack.c.l.b16 %v242
    %v277 = vunpack.c.h.b16 %v242
    %v278 = vunpack.c.l.b16 %v243
    %v279 = vunpack.c.h.b16 %v243
    %v280 = vpack.c.b16 %v266, %v264
    %v281 = vpack.c.b16 %v267, %v265
    %v282 = vpack.c.b16 %v270, %v268
    %v283 = vpack.c.b16 %v271, %v269
    %v284 = vpack.c.b16 %v274, %v272
    %v285 = vpack.c.b16 %v275, %v273
    %v286 = vpack.c.b16 %v278, %v276
    %v287 = vpack.c.b16 %v279, %v277
    %296 = vmatprep.subr.bf16.mxu0 0
    %297 = vmatpush1.bf16.msra.mxu0 0
    %298 = vmatprep.subr.bf16.mxu0 0
    %299 = vmatpush1.bf16.msra.mxu0 0
    %300 = vmatprep.subr.bf16.mxu0 0
    %301 = vmatpush1.bf16.msra.mxu0 0
    %302 = vmatprep.subr.bf16.mxu0 0
    %303 = vmatpush1.bf16.msra.mxu0 0
    %304 = vmatprep.subr.bf16.mxu0 %v287
    %305 = vmatpush1.bf16.msra.mxu0 %v286
    %306 = vmatprep.subr.bf16.mxu0 %v285
    %307 = vmatpush1.bf16.msra.mxu0 %v284
    %308 = vmatprep.subr.bf16.mxu0 %v283
    %309 = vmatpush1.bf16.msra.mxu0 %v282
    %310 = vmatprep.subr.bf16.mxu0 %v281
    %311 = vmatpush1.bf16.msra.mxu0 %v280
    %312 = vmatprep.subr.bf16.mxu0 0
    %313 = vmatpush2.bf16.msra.mxu0 0
    %314 = vmatprep.subr.bf16.mxu0 0
    %315 = vmatpush2.bf16.msra.mxu0 0
    %316 = vmatprep.subr.bf16.mxu0 0
    %317 = vmatpush2.bf16.msra.mxu0 0
    %318 = vmatprep.subr.bf16.mxu0 0
    %319 = vmatpush2.bf16.msra.mxu0 0
    %320 = vmatprep.subr.bf16.mxu0 0
    %321 = vmatpush2.bf16.msra.mxu0 0
    %322 = vmatprep.subr.bf16.mxu0 0
    %323 = vmatpush2.bf16.msra.mxu0 0
    %324 = vmatprep.subr.bf16.mxu0 0
    %325 = vmatpush2.bf16.msra.mxu0 0
    %326 = vmatprep.subr.bf16.mxu0 0
    %327 = vmatpush2.bf16.msra.mxu0 0
    %328 = vmatprep.mubr.bf16.mxu0 0
    %329 = vmatmul.mubr.bf16.gmra.mxu0 %v142
    %v330 = vpop.f32.mrf.mxu0
    %v331 = vadd.f32 %v249, %v330
    %v332 = vpop.f32.mrf.mxu0
    %v333 = vadd.f32 %v253, %v332
    %v334 = vpop.f32.mrf.mxu0
    %v335 = vadd.f32 %v249, %v334
    %v336 = vpop.f32.mrf.mxu0
    %v337 = vadd.f32 %v253, %v336
    %338 = vmatprep.mubr.bf16.mxu0 0
    %339 = vmatmul.mubr.bf16.gmra.mxu0 %v145
    %v340 = vpop.f32.mrf.mxu0
    %v341 = vadd.f32 %v249, %v340
    %v342 = vpop.f32.mrf.mxu0
    %v343 = vadd.f32 %v253, %v342
    %v344 = vpop.f32.mrf.mxu0
    %v345 = vadd.f32 %v249, %v344
    %v346 = vpop.f32.mrf.mxu0
    %v347 = vadd.f32 %v253, %v346
    %348 = vdwg.mxu0
    %v349 = vmax.f32 %v331, 0.0
    %v350 = vmax.f32 %v333, 0.0
    %v351 = vmax.f32 %v335, 0.0
    %v352 = vmax.f32 %v337, 0.0
    %v353 = vmax.f32 %v341, 0.0
    %v354 = vmax.f32 %v343, 0.0
    %v355 = vmax.f32 %v345, 0.0
    %v356 = vmax.f32 %v347, 0.0
    %v357 = vpack.c.bf16 %v351, %v349
    %v358 = vpack.c.bf16 %v352, %v350
    %v359 = vpack.c.bf16 %v355, %v353
    %v360 = vpack.c.bf16 %v356, %v354
    %v365 = vunpack.c.l.b16 %v357
    %v366 = vunpack.c.l.b16 %v358
    %v367 = vunpack.c.h.b16 %v357
    %v368 = vunpack.c.h.b16 %v358
    %v369 = vunpack.c.l.b16 %v359
    %v370 = vunpack.c.l.b16 %v360
    %v371 = vunpack.c.h.b16 %v359
    %v372 = vunpack.c.h.b16 %v360
    %v373 = vpack.c.b16 %v366, %v365
    %v374 = vpack.c.b16 %v368, %v367
    %v375 = vpack.c.b16 %v370, %v369
    %v376 = vpack.c.b16 %v372, %v371
    %381 = vst [vmem:[#allocation9] sm:$0xff] %v373
    %382 = vst [vmem:[#allocation9 + $0x8] sm:$0xff] %v374
    %383 = vst [vmem:[#allocation9 + $0x10] sm:$0xff] %v375
    %384 = vst [vmem:[#allocation9 + $0x18] sm:$0xff] %v376
    // Predicated region
    $region34: #{tpu_custom_call.1} parent=1 // pred_check
      _
    $region35: #{tpu_custom_call.1} parent=1 // pred_check_branch
      %386 = sbr.rel (0) target = $region37
    $region36: #{tpu_custom_call.1} parent=1 // pred_region
      %s388 = ssub.s32 512, 512
      %389 = vsyncadd [#allocation4], %s388
      %s390 = sshll.u32 [#allocation8], 4
      %s391 = int_to_ptr.vmem [resolvable:$true] %s390
      %396 = dma.vmem_to_hbm [thread:$0]  %s391, 512, %s5, [#allocation4], 128, 128, 8
    $region37: #{tpu_custom_call.1} parent=1 // pred_fallthru
      _
    // Predicated region
    $region38: #{tpu_custom_call.1} parent=1 // pred_check
      _
    $region39: #{tpu_custom_call.1} parent=1 // pred_check_branch
      %398 = sbr.rel (0) target = $region41
    $region40: #{tpu_custom_call.1} parent=1 // pred_region
      %s400 = ssub.s32 512, 512
      %401 = vsyncadd [#allocation10], %s400
      %s402 = sshll.u32 [#allocation9], 4
      %s403 = int_to_ptr.vmem [resolvable:$true] %s402
      %408 = dma.vmem_to_hbm [thread:$0]  %s403, 512, %s6, [#allocation10], 128, 128, 8
    $region41: #{tpu_custom_call.1} parent=1 // pred_fallthru
      _
    // Predicated region
    $region42: #{tpu_custom_call.1} parent=1 // pred_check
      _
    $region43: #{tpu_custom_call.1} parent=1 // pred_check_branch
      %410 = sbr.rel (0) target = $region45
    $region44: #{tpu_custom_call.1} parent=1 // pred_region
      %411 = dma.done [#allocation4], 512
    $region45: #{tpu_custom_call.1} parent=1 // pred_fallthru
      _
    // Predicated region
    $region46: #{tpu_custom_call.1} parent=1 // pred_check
      _
    $region47: #{tpu_custom_call.1} parent=1 // pred_check_branch
      %413 = sbr.rel (0) target = $region49
    $region48: #{tpu_custom_call.1} parent=1 // pred_region
      %414 = dma.done [#allocation10], 512
    $region49: #{tpu_custom_call.1} parent=1 // pred_fallthru
      _
    %415 = vsyncpa [#allocation3], 1
    %416 = vsyncpa [#allocation6], 1
    %417 = vsyncpa [#allocation4], 1
    %418 = vsyncpa [#allocation10], 1

</llo_original>
